<compile_context>
chip_gen: v7x
topology: tpu7x:2x2x1
jax: 0.10.0
libtpu: 0.0.40
codegen_flags: <defaults>
</compile_context>

<pallas_src>
import jax
import jax.numpy as jnp
from jax.experimental import pallas as pl
from jax.experimental.pallas import tpu as pltpu

_WIDTHS = (512, 256, 128)        # lane-dense candidate block widths (multiples of 128)
_TILE_ELEMS = 512 * 1024         # ~2 MiB f32 per tile -> 6 double-buffered tiles ~12 MiB
_PALLAS_MIN_ELEMS = 1 << 20      # below this, launch + DMA setup overhead dominates


def _fuse_kernel(rgb_ref, t_ref, out_ref):
    # Pure VPU elementwise fusion on one lane-dense (rows x width) tile.
    out_ref[...] = rgb_ref[...] + t_ref[...]


def _fuse_pallas_2d(rgb2, t2, block_rows):
    rows, cols = rgb2.shape
    grid = (pl.cdiv(rows, block_rows),)           # ragged last block is masked by Pallas
    spec = pl.BlockSpec((block_rows, cols), lambda i: (i, 0))
    itemsize = jnp.dtype(rgb2.dtype).itemsize
    return pl.pallas_call(
        _fuse_kernel,
        out_shape=jax.ShapeDtypeStruct((rows, cols), rgb2.dtype),
        grid=grid,
        in_specs=[spec, spec],
        out_specs=spec,
        compiler_params=pltpu.CompilerParams(
            dimension_semantics=("parallel",),
            vmem_limit_bytes=64 << 20),
        cost_estimate=pl.CostEstimate(
            flops=rows * cols,
            transcendentals=0,
            bytes_accessed=3 * rows * cols * itemsize),
    )(rgb2, t2)


def fuse_block_discriminative(rgb, t, *, force_pallas=False):
    """rgb, t: NCHW arrays of identical shape/dtype. Returns fused NCHW array."""
    assert rgb.shape == t.shape, "rgb and t must have the same shape"
    assert rgb.dtype == t.dtype, "rgb and t must have the same dtype"
    total = rgb.size

    # Tiny inputs: the pallas launch + 3 DMAs dwarf a couple of vreg adds;
    # let XLA fuse it into the surrounding graph instead.
    if total < _PALLAS_MIN_ELEMS and not force_pallas:
        return rgb + t

    # Pick the widest lane-dense width that divides the element count exactly
    # so the (contiguous) reshape is a free bitcast and no padding copy is needed.
    width = next((w for w in _WIDTHS if total % w == 0), None)
    if width is None:
        # Ragged total: a pad/slice round trip would re-copy both inputs
        # through HBM on a bandwidth-bound op — let XLA fuse the add instead.
        return rgb + t

    rows = total // width
    tile_rows = _TILE_ELEMS // width              # 1024 / 2048 / 4096, all multiples of 8
    block_rows = rows if rows <= tile_rows else tile_rows

    fused2 = _fuse_pallas_2d(
        rgb.reshape(rows, width),
        t.reshape(rows, width),
        block_rows,
    )
    return fused2.reshape(rgb.shape)


if __name__ == "__main__":
    key = jax.random.PRNGKey(0)
    k_rgb, k_t, k_rgb2, k_t2 = jax.random.split(key, 4)

    # --- small shape consistent with the module (force the Pallas path so the
    #     kernel itself is exercised on-device) ---
    B, C, H, W = 2, 4, 16, 16
    rgb = jax.random.normal(k_rgb, (B, C, H, W), dtype=jnp.float32)
    t = jax.random.normal(k_t, (B, C, H, W), dtype=jnp.float32)

    out = fuse_block_discriminative(rgb, t, force_pallas=True)
    out = jax.block_until_ready(out)
    assert out.shape == (B, C, H, W)
    assert jnp.allclose(out, rgb + t, atol=1e-6), "small-shape mismatch"

    # --- medium shape: exercises the multi-step grid with a masked final block
    #     (1296 rows of width 512 with 1024-row tiles -> grid of 2) ---
    B2, C2, H2, W2 = 2, 4, 288, 288
    rgb_m = jax.random.normal(k_rgb2, (B2, C2, H2, W2), dtype=jnp.float32)
    t_m = jax.random.normal(k_t2, (B2, C2, H2, W2), dtype=jnp.float32)

    out_m = fuse_block_discriminative(rgb_m, t_m, force_pallas=True)
    out_m = jax.block_until_ready(out_m)
    assert out_m.shape == (B2, C2, H2, W2)
    assert jnp.allclose(out_m, rgb_m + t_m, atol=1e-6), "tiled/masked-path mismatch"

    # Default (non-forced) small path just uses XLA fusion.
    out_xla = jax.block_until_ready(fuse_block_discriminative(rgb, t))
    assert jnp.allclose(out_xla, rgb + t, atol=1e-6)

    print("KERNEL_OK")
</pallas_src>

<mosaic_0001>
module attributes {stable_mosaic.version = 11 : i64} {
  func.func @_fuse_kernel(%arg0: i32, %arg1: memref<4x512xf32, #tpu.memory_space<vmem>>, %arg2: memref<4x512xf32, #tpu.memory_space<vmem>>, %arg3: memref<4x512xf32, #tpu.memory_space<vmem>>) attributes {dimension_semantics = [#tpu.dimension_semantics<parallel>], iteration_bounds = array<i64: 1>, scalar_prefetch = 0 : i64, scratch_operands = 0 : i64, tpu.core_type = #tpu.core_type<tc>, window_params = [{transform_indices = @transform_0, window_bounds = array<i64: 4, 512>}, {transform_indices = @transform_1, window_bounds = array<i64: 4, 512>}, {transform_indices = @transform_2, window_bounds = array<i64: 4, 512>}]} {
    %c0 = arith.constant 0 : index
    %c0_0 = arith.constant 0 : index
    %0 = vector.load %arg1[%c0, %c0_0] : memref<4x512xf32, #tpu.memory_space<vmem>>, vector<4x512xf32>
    %c0_1 = arith.constant 0 : index
    %c0_2 = arith.constant 0 : index
    %1 = vector.load %arg2[%c0_1, %c0_2] : memref<4x512xf32, #tpu.memory_space<vmem>>, vector<4x512xf32>
    %2 = arith.addf %0, %1 : vector<4x512xf32>
    %c0_3 = arith.constant 0 : index
    %c0_4 = arith.constant 0 : index
    %3 = vector.load %arg3[%c0_3, %c0_4] : memref<4x512xf32, #tpu.memory_space<vmem>>, vector<4x512xf32>
    tpu.vector_store %arg3[%c0_3, %c0_4], %2 {strides = array<i32>} : memref<4x512xf32, #tpu.memory_space<vmem>>, vector<4x512xf32>,
    return
  }
  func.func @transform_0(%arg0: i32) -> (i32, i32) {
    %c0_i32 = arith.constant 0 : i32
    %c0_i32_0 = arith.constant 0 : i32
    return %arg0, %c0_i32 : i32, i32
  }
  func.func @transform_1(%arg0: i32) -> (i32, i32) {
    %c0_i32 = arith.constant 0 : i32
    %c0_i32_0 = arith.constant 0 : i32
    return %arg0, %c0_i32 : i32, i32
  }
  func.func @transform_2(%arg0: i32) -> (i32, i32) {
    %c0_i32 = arith.constant 0 : i32
    %c0_i32_0 = arith.constant 0 : i32
    return %arg0, %c0_i32 : i32, i32
  }
}

</mosaic_0001>

<llo_original>
// kernel: tpu_custom_call.1
$region0: #{tpu_custom_call.1}
  #allocation0 [shape = 'u32[]', space=smem, size = 0x4, offset = 0x4, fixed_abs, tag = 'smem constant byte address 0x4 - core index']
  #allocation1 [shape = 'u32[144,128]{1,0:T(1,128)}', space=vmem, size = 0x12000, scoped, tag = 'internal scratch']
  %s0 = inlined_call_operand.hbm [shape: f32[4,512], index: 0, kind: input, shape index: {}]
  %s1 = inlined_call_operand.hbm [shape: f32[4,512], index: 1, kind: input, shape index: {}]
  %s2 = inlined_call_operand.hbm [shape: f32[4,512], index: 2, kind: output, shape index: {}]
  %s3 = sld [smem:[#allocation0]]
  $region26: #{tpu_custom_call.1} parent=0
    _
  %s5 = ssub.s32 1, %s3
  %s6 = scalar_select 0, %s5, %s3
  $region1: #{tpu_custom_call.1} parent=0
    #allocation2 [shape = 'u8[8192]{0}', space=vmem, size = 0x2000, scoped, tag = 'input window, operand 0, single buffered']
    #allocation3 [shape = 's32[1]{0}', space=sflag, size = 0x4, scoped, tag = 'scoped memory for tpu_custom_call.1']
    #allocation4 [shape = 's32[1]{0}', space=sflag, size = 0x4, scoped, tag = 'scoped memory for tpu_custom_call.1']
    #allocation5 [shape = 'u8[8192]{0}', space=vmem, size = 0x2000, scoped, tag = 'input window, operand 1, single buffered']
    #allocation6 [shape = 's32[1]{0}', space=sflag, size = 0x4, scoped, tag = 'scoped memory for tpu_custom_call.1']
    #allocation7 [shape = 'u8[8192]{0}', space=vmem, size = 0x2000, scoped, tag = 'output window, operand 0, single buffered']
    %7 = vsyncpa [#allocation3], 0
    %8 = vsyncpa [#allocation6], 0
    %9 = vsyncpa [#allocation4], 0
    // Predicated region
    $region2: #{tpu_custom_call.1} parent=1 // pred_check
      _
    $region3: #{tpu_custom_call.1} parent=1 // pred_check_branch
      %11 = sbr.rel (0) target = $region5
    $region4: #{tpu_custom_call.1} parent=1 // pred_region
      %s13 = ssub.s32 256, 256
      %14 = vsyncadd [#allocation3], %s13
      %s16 = sshll.u32 [#allocation2], 4
      %s17 = int_to_ptr.vmem [resolvable:$true] %s16
      %19 = dma.hbm_to_vmem [thread:$0]  %s0, 256, %s17, [#allocation3]
    $region5: #{tpu_custom_call.1} parent=1 // pred_fallthru
      _
    // Predicated region
    $region6: #{tpu_custom_call.1} parent=1 // pred_check
      _
    $region7: #{tpu_custom_call.1} parent=1 // pred_check_branch
      %21 = sbr.rel (0) target = $region9
    $region8: #{tpu_custom_call.1} parent=1 // pred_region
      %s23 = ssub.s32 256, 256
      %24 = vsyncadd [#allocation6], %s23
      %s26 = sshll.u32 [#allocation5], 4
      %s27 = int_to_ptr.vmem [resolvable:$true] %s26
      %29 = dma.hbm_to_vmem [thread:$0]  %s1, 256, %s27, [#allocation6]
    $region9: #{tpu_custom_call.1} parent=1 // pred_fallthru
      _
    // Predicated region
    $region10: #{tpu_custom_call.1} parent=1 // pred_check
      _
    $region11: #{tpu_custom_call.1} parent=1 // pred_check_branch
      %31 = sbr.rel (0) target = $region13
    $region12: #{tpu_custom_call.1} parent=1 // pred_region
      %32 = dma.done [#allocation3], 256
    $region13: #{tpu_custom_call.1} parent=1 // pred_fallthru
      _
    // Predicated region
    $region14: #{tpu_custom_call.1} parent=1 // pred_check
      _
    $region15: #{tpu_custom_call.1} parent=1 // pred_check_branch
      %34 = sbr.rel (0) target = $region17
    $region16: #{tpu_custom_call.1} parent=1 // pred_region
      %35 = dma.done [#allocation6], 256
    $region17: #{tpu_custom_call.1} parent=1 // pred_fallthru
      _
    %v36 = vld [vmem:[#allocation2] sm:$0xff]
    %v37 = vld [vmem:[#allocation2 + $0x8] sm:$0xff]
    %v38 = vld [vmem:[#allocation5] sm:$0xff]
    %v39 = vld [vmem:[#allocation5 + $0x8] sm:$0xff]
    %v40 = vadd.f32 %v36, %v38
    %v41 = vadd.f32 %v37, %v39
    %42 = vst [vmem:[#allocation7] sm:$0xff] %v40
    %43 = vst [vmem:[#allocation7 + $0x8] sm:$0xff] %v41
    // Predicated region
    $region18: #{tpu_custom_call.1} parent=1 // pred_check
      _
    $region19: #{tpu_custom_call.1} parent=1 // pred_check_branch
      %45 = sbr.rel (0) target = $region21
    $region20: #{tpu_custom_call.1} parent=1 // pred_region
      %s47 = ssub.s32 256, 256
      %48 = vsyncadd [#allocation4], %s47
      %s50 = sshll.u32 [#allocation7], 4
      %s51 = int_to_ptr.vmem [resolvable:$true] %s50
      %53 = dma.vmem_to_hbm [thread:$0]  %s51, 256, %s2, [#allocation4]
    $region21: #{tpu_custom_call.1} parent=1 // pred_fallthru
      _
    // Predicated region
    $region22: #{tpu_custom_call.1} parent=1 // pred_check
      _
    $region23: #{tpu_custom_call.1} parent=1 // pred_check_branch
      %55 = sbr.rel (0) target = $region25
    $region24: #{tpu_custom_call.1} parent=1 // pred_region
      %56 = dma.done [#allocation4], 256
    $region25: #{tpu_custom_call.1} parent=1 // pred_fallthru
      _
    %57 = vsyncpa [#allocation3], 1
    %58 = vsyncpa [#allocation6], 1
    %59 = vsyncpa [#allocation4], 1

</llo_original>
